<compile_context>
chip_gen: v5e
topology: v5e:2x2
jax: 0.10.0
libtpu: 0.0.40
codegen_flags: <defaults>
</compile_context>

<pallas_src>
import jax
import jax.numpy as jnp
import numpy as np
from jax.experimental import pallas as pl
from jax.experimental.pallas import tpu as pltpu


def ffn3d_kernel(x_ref, w1_ref, b1_ref, w2_ref, b2_ref, o_ref):
    # x_ref: (Cin, tile_s)  -- channels on sublanes, spatial on lanes.
    x = x_ref[...]

    # fc1: 1x1x1 conv (BN1 scale pre-folded into W1'), f32 accumulation on the MXU.
    h = jnp.dot(w1_ref[...], x, preferred_element_type=jnp.float32)   # (Ch, tile_s)
    h = h + b1_ref[...]                                               # (Ch, 1) bcast over lanes

    # Exact (erf) GELU in f32 -- matches PyTorch nn.GELU().
    h = 0.5 * h * (1.0 + jax.lax.erf(h * jnp.float32(0.7071067811865476)))

    # fc2: 1x1x1 conv (BN2 scale pre-folded into W2').
    z = jnp.dot(w2_ref[...], h.astype(w2_ref.dtype),
                preferred_element_type=jnp.float32)                   # (Cout, tile_s)
    z = z + b2_ref[...]

    # Residual (DropPath(0.0) == Identity).  Lane-dense store along spatial.
    o_ref[...] = (x.astype(jnp.float32) + z).astype(o_ref.dtype)


def _round_up(v, m):
    return ((v + m - 1) // m) * m


def ffn3d_pallas(x_ncdhw, w1, bn1, w2, bn2, *, max_tile=2048, eps=1e-5):
    """x_ncdhw: (N, Cin, D, H, W).  w1: (Ch, Cin), w2: (Cout, Ch) (1x1x1 Conv3d weights,
    squeezed).  bn1/bn2: dicts with gamma/beta/mean/var (eval-mode running stats).
    Returns (N, Cout, D, H, W)."""
    # TODO(synk): training-mode BatchNorm (batch statistics + running-stat updates) is not
    # implemented; this kernel folds eval-mode BN into the conv weights.
    N, Cin, D, H, W = x_ncdhw.shape
    Ch = w1.shape[0]
    Cout = w2.shape[0]
    assert Cout == Cin, "residual add requires out_channels == in_channels"

    # Fold eval-mode BatchNorm into the conv weights (scale) + a per-channel bias.
    s1 = (bn1["gamma"] / jnp.sqrt(bn1["var"] + eps)).astype(jnp.float32)
    b1 = (bn1["beta"] - bn1["mean"] * s1).astype(jnp.float32)
    s2 = (bn2["gamma"] / jnp.sqrt(bn2["var"] + eps)).astype(jnp.float32)
    b2 = (bn2["beta"] - bn2["mean"] * s2).astype(jnp.float32)

    in_dtype = x_ncdhw.dtype
    w1p = (w1.astype(jnp.float32) * s1[:, None]).astype(in_dtype)   # (Ch, Cin)
    w2p = (w2.astype(jnp.float32) * s2[:, None]).astype(in_dtype)   # (Cout, Ch)
    b1c = b1.reshape(Ch, 1)
    b2c = b2.reshape(Cout, 1)

    # Reshape only (no transpose): NCDHW -> (N, Cin, S).  Spatial becomes the lane axis.
    S = D * H * W
    x3 = x_ncdhw.reshape(N, Cin, S)

    # Spatial tile: a multiple of 128 lanes, as large as reasonable (capped at max_tile).
    tile_s = min(max_tile, _round_up(S, 128))
    S_pad = _round_up(S, tile_s)
    if S_pad != S:
        x3 = jnp.pad(x3, ((0, 0), (0, 0), (0, S_pad - S)))

    # Explicit VMEM budget: 2x double-buffered in/out activation tiles + hidden f32 +
    # weights, with slack; capped at 48 MiB so it also fits v7x's 64 MiB physical VMEM.
    isz = jnp.dtype(in_dtype).itemsize
    est = (2 * (Cin + Cout) * tile_s * isz          # double-buffered x / out tiles
           + Ch * tile_s * 4                        # f32 hidden intermediate
           + (Ch * Cin + Cout * Ch) * isz * 2
           + (Ch + Cout) * 4 * 2)
    vmem_limit = int(min(max(4 * est, 16 << 20), 48 << 20))

    grid = (N, S_pad // tile_s)

    out3 = pl.pallas_call(
        ffn3d_kernel,
        out_shape=jax.ShapeDtypeStruct((N, Cout, S_pad), in_dtype),
        grid_spec=pltpu.PrefetchScalarGridSpec(
            num_scalar_prefetch=0,
            grid=grid,
            in_specs=[
                pl.BlockSpec((None, Cin, tile_s), lambda n, j: (n, 0, j)),  # x tile
                pl.BlockSpec((Ch, Cin), lambda n, j: (0, 0)),               # W1' (scale-folded)
                pl.BlockSpec((Ch, 1), lambda n, j: (0, 0)),                 # BN1 bias
                pl.BlockSpec((Cout, Ch), lambda n, j: (0, 0)),              # W2' (scale-folded)
                pl.BlockSpec((Cout, 1), lambda n, j: (0, 0)),               # BN2 bias
            ],
            out_specs=pl.BlockSpec((None, Cout, tile_s), lambda n, j: (n, 0, j)),
        ),
        compiler_params=pltpu.CompilerParams(
            dimension_semantics=("parallel", "parallel"),
            vmem_limit_bytes=vmem_limit,
        ),
    )(x3, w1p, b1c, w2p, b2c)

    if S_pad != S:
        out3 = out3[:, :, :S]
    return out3.reshape(N, Cout, D, H, W)


def ffn3d_reference(x, w1, bn1, w2, bn2, eps=1e-5):
    """Pure-JAX reference mirroring the PyTorch forward (eval mode)."""
    xc = jnp.transpose(x, (0, 2, 3, 4, 1)).astype(jnp.float32)        # N,D,H,W,C
    h = jnp.einsum("ndhwc,oc->ndhwo", xc, w1.astype(jnp.float32))
    h = (h - bn1["mean"]) / jnp.sqrt(bn1["var"] + eps) * bn1["gamma"] + bn1["beta"]
    h = 0.5 * h * (1.0 + jax.lax.erf(h / jnp.sqrt(2.0)))
    z = jnp.einsum("ndhwc,oc->ndhwo", h, w2.astype(jnp.float32))
    z = (z - bn2["mean"]) / jnp.sqrt(bn2["var"] + eps) * bn2["gamma"] + bn2["beta"]
    out = xc + z
    return jnp.transpose(out, (0, 4, 1, 2, 3)).astype(x.dtype)


if __name__ == "__main__":
    # Small shapes implied by the module: Conv3d/BatchNorm3d -> 5-D NCDHW input.
    N, Cin, D, H, W = 2, 4, 4, 8, 8
    hidden = 8
    Cout = Cin  # residual add requires this

    key = jax.random.PRNGKey(0)
    ks = jax.random.split(key, 11)
    x = jax.random.normal(ks[0], (N, Cin, D, H, W), dtype=jnp.float32)

    # Conv3d kernel_size=1, bias=False -> weight (out, in, 1, 1, 1); keep squeezed (out, in).
    w1 = jax.random.normal(ks[1], (hidden, Cin), dtype=jnp.float32) * 0.2
    w2 = jax.random.normal(ks[2], (Cout, hidden), dtype=jnp.float32) * 0.2

    # Deterministic (non-trivial) BatchNorm3d params, eval-mode semantics.
    bn1 = dict(
        gamma=1.0 + 0.1 * jax.random.normal(ks[3], (hidden,), dtype=jnp.float32),
        beta=0.1 * jax.random.normal(ks[4], (hidden,), dtype=jnp.float32),
        mean=0.1 * jax.random.normal(ks[5], (hidden,), dtype=jnp.float32),
        var=jnp.abs(1.0 + 0.1 * jax.random.normal(ks[6], (hidden,), dtype=jnp.float32)),
    )
    bn2 = dict(
        gamma=1.0 + 0.1 * jax.random.normal(ks[7], (Cout,), dtype=jnp.float32),
        beta=0.1 * jax.random.normal(ks[8], (Cout,), dtype=jnp.float32),
        mean=0.1 * jax.random.normal(ks[9], (Cout,), dtype=jnp.float32),
        var=jnp.abs(1.0 + 0.1 * jax.random.normal(ks[10], (Cout,), dtype=jnp.float32)),
    )

    out = jax.block_until_ready(ffn3d_pallas(x, w1, bn1, w2, bn2))
    ref = jax.block_until_ready(ffn3d_reference(x, w1, bn1, w2, bn2))

    np.testing.assert_allclose(np.asarray(out), np.asarray(ref), rtol=1e-5, atol=1e-5)
    print("KERNEL_OK")
</pallas_src>

<mosaic_0001>
module attributes {stable_mosaic.version = 11 : i64} {
  func.func @ffn3d_kernel(%arg0: i32, %arg1: i32, %arg2: memref<1x4x256xf32, #tpu.memory_space<vmem>>, %arg3: memref<8x4xf32, #tpu.memory_space<vmem>>, %arg4: memref<8x1xf32, #tpu.memory_space<vmem>>, %arg5: memref<4x8xf32, #tpu.memory_space<vmem>>, %arg6: memref<4x1xf32, #tpu.memory_space<vmem>>, %arg7: memref<1x4x256xf32, #tpu.memory_space<vmem>>) attributes {dimension_semantics = [#tpu.dimension_semantics<parallel>, #tpu.dimension_semantics<parallel>], iteration_bounds = array<i64: 2, 1>, scalar_prefetch = 0 : i64, scratch_operands = 0 : i64, tpu.core_type = #tpu.core_type<tc>, window_params = [{transform_indices = @transform_0, window_bounds = array<i64: 1, 4, 256>}, {pipeline_mode = #tpu.pipeline_mode<synchronous>, transform_indices = @transform_1, window_bounds = array<i64: 8, 4>}, {pipeline_mode = #tpu.pipeline_mode<synchronous>, transform_indices = @transform_2, window_bounds = array<i64: 8, 1>}, {pipeline_mode = #tpu.pipeline_mode<synchronous>, transform_indices = @transform_3, window_bounds = array<i64: 4, 8>}, {pipeline_mode = #tpu.pipeline_mode<synchronous>, transform_indices = @transform_4, window_bounds = array<i64: 4, 1>}, {transform_indices = @transform_5, window_bounds = array<i64: 1, 4, 256>}]} {
    %c0 = arith.constant 0 : index
    %c0_0 = arith.constant 0 : index
    %c0_1 = arith.constant 0 : index
    %0 = vector.load %arg2[%c0, %c0_0, %c0_1] : memref<1x4x256xf32, #tpu.memory_space<vmem>>, vector<1x4x256xf32>
    %1 = vector.shape_cast %0 : vector<1x4x256xf32> to vector<4x256xf32>
    %c0_2 = arith.constant 0 : index
    %c0_3 = arith.constant 0 : index
    %2 = vector.load %arg3[%c0_2, %c0_3] : memref<8x4xf32, #tpu.memory_space<vmem>>, vector<8x4xf32>
    %cst = arith.constant dense<0.000000e+00> : vector<8x256xf32>
    %3 = tpu.matmul %2, %1, %cst {dimension_numbers = #tpu.dot_dimension_numbers<[1], [0], [0], [1], [0, 0, 1, 1], [], []>} : vector<8x4xf32>, vector<4x256xf32>, vector<8x256xf32> -> vector<8x256xf32>
    %c0_4 = arith.constant 0 : index
    %c0_5 = arith.constant 0 : index
    %4 = vector.load %arg4[%c0_4, %c0_5] : memref<8x1xf32, #tpu.memory_space<vmem>>, vector<8x1xf32>
    %5 = vector.broadcast %4 : vector<8x1xf32> to vector<8x256xf32>
    %6 = arith.addf %3, %5 : vector<8x256xf32>
    %cst_6 = arith.constant 5.000000e-01 : f32
    %7 = vector.broadcast %cst_6 : f32 to vector<8x256xf32>
    %8 = arith.mulf %7, %6 : vector<8x256xf32>
    %cst_7 = arith.constant 0.707106769 : f32
    %9 = vector.broadcast %cst_7 : f32 to vector<8x256xf32>
    %10 = arith.mulf %6, %9 : vector<8x256xf32>
    %11 = math.erf %10 : vector<8x256xf32>
    %cst_8 = arith.constant 1.000000e+00 : f32
    %12 = vector.broadcast %cst_8 : f32 to vector<8x256xf32>
    %13 = arith.addf %12, %11 : vector<8x256xf32>
    %14 = arith.mulf %8, %13 : vector<8x256xf32>
    %c0_9 = arith.constant 0 : index
    %c0_10 = arith.constant 0 : index
    %15 = vector.load %arg5[%c0_9, %c0_10] : memref<4x8xf32, #tpu.memory_space<vmem>>, vector<4x8xf32>
    %cst_11 = arith.constant dense<0.000000e+00> : vector<4x256xf32>
    %16 = tpu.matmul %15, %14, %cst_11 {dimension_numbers = #tpu.dot_dimension_numbers<[1], [0], [0], [1], [0, 0, 1, 1], [], []>} : vector<4x8xf32>, vector<8x256xf32>, vector<4x256xf32> -> vector<4x256xf32>
    %c0_12 = arith.constant 0 : index
    %c0_13 = arith.constant 0 : index
    %17 = vector.load %arg6[%c0_12, %c0_13] : memref<4x1xf32, #tpu.memory_space<vmem>>, vector<4x1xf32>
    %18 = vector.broadcast %17 : vector<4x1xf32> to vector<4x256xf32>
    %19 = arith.addf %16, %18 : vector<4x256xf32>
    %20 = arith.addf %1, %19 : vector<4x256xf32>
    %c0_14 = arith.constant 0 : index
    %c0_15 = arith.constant 0 : index
    %c0_16 = arith.constant 0 : index
    %21 = vector.load %arg7[%c0_14, %c0_15, %c0_16] : memref<1x4x256xf32, #tpu.memory_space<vmem>>, vector<1x4x256xf32>
    %22 = vector.shape_cast %21 : vector<1x4x256xf32> to vector<4x256xf32>
    %23 = vector.shape_cast %20 : vector<4x256xf32> to vector<1x4x256xf32>
    tpu.vector_store %arg7[%c0_14, %c0_15, %c0_16], %23 {strides = array<i32>} : memref<1x4x256xf32, #tpu.memory_space<vmem>>, vector<1x4x256xf32>,
    return
  }
  func.func @transform_0(%arg0: i32, %arg1: i32) -> (i32, i32, i32) {
    %c0_i32 = arith.constant 0 : i32
    %c0_i32_0 = arith.constant 0 : i32
    return %arg0, %c0_i32, %arg1 : i32, i32, i32
  }
  func.func @transform_1(%arg0: i32, %arg1: i32) -> (i32, i32) {
    %c0_i32 = arith.constant 0 : i32
    %c0_i32_0 = arith.constant 0 : i32
    %c0_i32_1 = arith.constant 0 : i32
    return %c0_i32, %c0_i32_0 : i32, i32
  }
  func.func @transform_2(%arg0: i32, %arg1: i32) -> (i32, i32) {
    %c0_i32 = arith.constant 0 : i32
    %c0_i32_0 = arith.constant 0 : i32
    %c0_i32_1 = arith.constant 0 : i32
    return %c0_i32, %c0_i32_0 : i32, i32
  }
  func.func @transform_3(%arg0: i32, %arg1: i32) -> (i32, i32) {
    %c0_i32 = arith.constant 0 : i32
    %c0_i32_0 = arith.constant 0 : i32
    %c0_i32_1 = arith.constant 0 : i32
    return %c0_i32, %c0_i32_0 : i32, i32
  }
  func.func @transform_4(%arg0: i32, %arg1: i32) -> (i32, i32) {
    %c0_i32 = arith.constant 0 : i32
    %c0_i32_0 = arith.constant 0 : i32
    %c0_i32_1 = arith.constant 0 : i32
    return %c0_i32, %c0_i32_0 : i32, i32
  }
  func.func @transform_5(%arg0: i32, %arg1: i32) -> (i32, i32, i32) {
    %c0_i32 = arith.constant 0 : i32
    %c0_i32_0 = arith.constant 0 : i32
    return %arg0, %c0_i32, %arg1 : i32, i32, i32
  }
}

</mosaic_0001>

<llo_original>
// kernel: tpu_custom_call.1
$region0: #{tpu_custom_call.1}
  #allocation0 [shape = 'u32[]', space=smem, size = 0x4, offset = 0x4, fixed_abs, tag = 'smem constant byte address 0x4 - core index']
  #allocation1 [shape = 'u32[72,128]{1,0:T(1,128)}', space=vmem, size = 0x9000, scoped, tag = 'internal scratch']
  %s0 = inlined_call_operand.vmem [shape: f32[2,4,256], index: 0, kind: input, shape index: {}]
  %s1 = inlined_call_operand.vmem [shape: f32[8,4], index: 1, kind: input, shape index: {}]
  %s2 = inlined_call_operand.vmem [shape: f32[8,1], index: 2, kind: input, shape index: {}]
  %s3 = inlined_call_operand.vmem [shape: f32[4,8], index: 3, kind: input, shape index: {}]
  %s4 = inlined_call_operand.vmem [shape: f32[4,1], index: 4, kind: input, shape index: {}]
  %s5 = inlined_call_operand.hbm [shape: f32[2,4,256], index: 5, kind: output, shape index: {}]
  %s6 = sld [smem:[#allocation0]]
  $region53: #{tpu_custom_call.1} parent=0
    _
  %s8 = ssub.s32 1, %s6
  %s9 = scalar_select 0, %s8, %s6
  $region1: #{tpu_custom_call.1} parent=0
    #allocation2 [shape = 'u8[8192]{0}', space=vmem, size = 0x2000, scoped, tag = 'output window, operand 0']
    #allocation3 [shape = 's32[2]{0}', space=sflag, size = 0x8, scoped, tag = 'scoped memory for tpu_custom_call.1']
    %10 = vsyncpa [#allocation3], 0
    %s11 = scalar_lea.sflag [#allocation3], 1
    %12 = vsyncpa %s11, 0
    loop: start=0, step=1, limit=4
    $region2: #{tpu_custom_call.1} parent=1 // loop_pre_header
      _
    $region3: #{tpu_custom_call.1} parent=1 // loop_header
      %s14 = sphi 0, %s18
      %p15 = scmp.ge.s32.totalorder %s14, 4
      %s21 = sphi 0, %s33
      %s22 = sphi 0, %s29
      %s23 = sphi 0, %s21
      %s24 = sphi 0, %s22
      %s25 = sphi 0, %s23
      %s26 = sphi 0, %s24
      %s38 = sphi 0, %s40
      %s41 = sphi 0, %s38
      %s42 = sphi 0, %s41
      %s58 = sphi 0, %s42
      %s62 = sphi 0, %s62
      %s64 = sphi 0, %s62
      %s65 = sphi 0, %s64
      %s79 = sphi 0, %s65
      %s83 = sphi 0, %s83
      %s85 = sphi 0, %s83
      %s86 = sphi 0, %s85
      %s100 = sphi 0, %s86
      %s104 = sphi 0, %s104
      %s106 = sphi 0, %s104
      %s107 = sphi 0, %s106
      %s121 = sphi 0, %s107
      %s125 = sphi 0, %s125
      %s127 = sphi 0, %s125
      %s128 = sphi 0, %s127
      %s142 = sphi 0, %s128
      %s150 = sphi 0, %s152
      %s153 = sphi 0, %s150
      %s154 = sphi 0, %s153
      %s170 = sphi 0, %s154
    $region4: #{tpu_custom_call.1} parent=1 // loop_header_branch
      %17 = sbr.rel (%p15) target = $region8
    $region5: #{tpu_custom_call.1} parent=1 // loop_body
      %s19 = ssub.s32 %s14, 1
      %s20 = ssub.s32 %s14, 2
      %s27 = sadd.s32 1, %s22
      %p28 = scmp.ge.s32.totalorder %s27, 1
      %s29 = scalar_select %p28, 0, %s27
      %s30 = sadd.s32 1, %s21
      %s31 = scalar_select %p28, %s30, %s21
      %p32 = scmp.ge.s32.totalorder %s31, 2
      %s33 = scalar_select %p32, 0, %s31
      %s34 = ssub.s32 %s21, %s33
      %s35 = ssub.s32 %s22, %s29
      %s36 = sor.u32 %s34, %s35
      %p37 = scmp.eq.s32.totalorder %s36, 0
      %s39 = sadd.s32 %s38, 1
      %s40 = scalar_select %p37, %s38, %s39
      %p43 = pneg %p37
      %p44 = scmp.eq.s32.totalorder %s14, 1
      %p45 = por %p43, %p44
      %p46 = scmp.ne.s32.totalorder %s38, %s41
      %p47 = scmp.eq.s32.totalorder %s14, 0
      %p48 = por %p46, %p47
      %p49 = scmp.ne.s32.totalorder %s38, %s41
      %p50 = scmp.eq.s32.totalorder %s19, 1
      %p51 = por %p49, %p50
      %p52 = scmp.ne.s32.totalorder %s41, %s42
      %p53 = scmp.eq.s32.totalorder %s19, 0
      %p54 = por %p52, %p53
      %p55 = scmp.ne.s32.totalorder %s41, %s42
      %p56 = scmp.eq.s32.totalorder %s20, 1
      %p57 = por %p55, %p56
      %p59 = scmp.ne.s32.totalorder %s42, %s58
      %p60 = scmp.eq.s32.totalorder %s20, 0
      %p61 = por %p59, %p60
      %s63 = sadd.s32 %s62, 1
      %p66 = scmp.eq.s32.totalorder %s14, 1
      %p67 = scmp.ne.s32.totalorder %s62, %s64
      %p68 = scmp.eq.s32.totalorder %s14, 0
      %p69 = por %p67, %p68
      %p70 = scmp.ne.s32.totalorder %s62, %s64
      %p71 = scmp.eq.s32.totalorder %s19, 1
      %p72 = por %p70, %p71
      %p73 = scmp.ne.s32.totalorder %s64, %s65
      %p74 = scmp.eq.s32.totalorder %s19, 0
      %p75 = por %p73, %p74
      %p76 = scmp.ne.s32.totalorder %s64, %s65
      %p77 = scmp.eq.s32.totalorder %s20, 1
      %p78 = por %p76, %p77
      %p80 = scmp.ne.s32.totalorder %s65, %s79
      %p81 = scmp.eq.s32.totalorder %s20, 0
      %p82 = por %p80, %p81
      %s84 = sadd.s32 %s83, 1
      %p87 = scmp.eq.s32.totalorder %s14, 1
      %p88 = scmp.ne.s32.totalorder %s83, %s85
      %p89 = scmp.eq.s32.totalorder %s14, 0
      %p90 = por %p88, %p89
      %p91 = scmp.ne.s32.totalorder %s83, %s85
      %p92 = scmp.eq.s32.totalorder %s19, 1
      %p93 = por %p91, %p92
      %p94 = scmp.ne.s32.totalorder %s85, %s86
      %p95 = scmp.eq.s32.totalorder %s19, 0
      %p96 = por %p94, %p95
      %p97 = scmp.ne.s32.totalorder %s85, %s86
      %p98 = scmp.eq.s32.totalorder %s20, 1
      %p99 = por %p97, %p98
      %p101 = scmp.ne.s32.totalorder %s86, %s100
      %p102 = scmp.eq.s32.totalorder %s20, 0
      %p103 = por %p101, %p102
      %s105 = sadd.s32 %s104, 1
      %p108 = scmp.eq.s32.totalorder %s14, 1
      %p109 = scmp.ne.s32.totalorder %s104, %s106
      %p110 = scmp.eq.s32.totalorder %s14, 0
      %p111 = por %p109, %p110
      %p112 = scmp.ne.s32.totalorder %s104, %s106
      %p113 = scmp.eq.s32.totalorder %s19, 1
      %p114 = por %p112, %p113
      %p115 = scmp.ne.s32.totalorder %s106, %s107
      %p116 = scmp.eq.s32.totalorder %s19, 0
      %p117 = por %p115, %p116
      %p118 = scmp.ne.s32.totalorder %s106, %s107
      %p119 = scmp.eq.s32.totalorder %s20, 1
      %p120 = por %p118, %p119
      %p122 = scmp.ne.s32.totalorder %s107, %s121
      %p123 = scmp.eq.s32.totalorder %s20, 0
      %p124 = por %p122, %p123
      %s126 = sadd.s32 %s125, 1
      %p129 = scmp.eq.s32.totalorder %s14, 1
      %p130 = scmp.ne.s32.totalorder %s125, %s127
      %p131 = scmp.eq.s32.totalorder %s14, 0
      %p132 = por %p130, %p131
      %p133 = scmp.ne.s32.totalorder %s125, %s127
      %p134 = scmp.eq.s32.totalorder %s19, 1
      %p135 = por %p133, %p134
      %p136 = scmp.ne.s32.totalorder %s127, %s128
      %p137 = scmp.eq.s32.totalorder %s19, 0
      %p138 = por %p136, %p137
      %p139 = scmp.ne.s32.totalorder %s127, %s128
      %p140 = scmp.eq.s32.totalorder %s20, 1
      %p141 = por %p139, %p140
      %p143 = scmp.ne.s32.totalorder %s128, %s142
      %p144 = scmp.eq.s32.totalorder %s20, 0
      %p145 = por %p143, %p144
      %s146 = ssub.s32 %s21, %s33
      %s147 = ssub.s32 %s22, %s29
      %s148 = sor.u32 %s146, %s147
      %p149 = scmp.eq.s32.totalorder %s148, 0
      %s151 = sadd.s32 %s150, 1
      %s152 = scalar_select %p149, %s150, %s151
      %p155 = pneg %p149
      %p156 = scmp.eq.s32.totalorder %s14, 1
      %p157 = por %p155, %p156
      %p158 = scmp.ne.s32.totalorder %s150, %s153
      %p159 = scmp.eq.s32.totalorder %s14, 0
      %p160 = por %p158, %p159
      %p161 = scmp.ne.s32.totalorder %s150, %s153
      %p162 = scmp.eq.s32.totalorder %s19, 1
      %p163 = por %p161, %p162
      %p164 = scmp.ne.s32.totalorder %s153, %s154
      %p165 = scmp.eq.s32.totalorder %s19, 0
      %p166 = por %p164, %p165
      %p167 = scmp.ne.s32.totalorder %s153, %s154
      %p168 = scmp.eq.s32.totalorder %s20, 1
      %p169 = por %p167, %p168
      %p171 = scmp.ne.s32.totalorder %s154, %s170
      %p172 = scmp.eq.s32.totalorder %s20, 0
      %p173 = por %p171, %p172
      %p174 = scmp.le.s32.totalorder 1, %s14
      %p175 = scmp.lt.s32.totalorder %s14, 3
      %p176 = pnand %p174, %p175
      %p177 = pneg %p176
      // Predicated region
      $region9: #{tpu_custom_call.1} parent=5 // pred_check
        _
      $region10: #{tpu_custom_call.1} parent=5 // pred_check_branch
        %179 = sbr.rel (%p176) target = $region12
      $region11: #{tpu_custom_call.1} parent=5 // pred_region
        %s180 = ssub.s32 %s14, 1
        // Predicated region
        $region13: #{tpu_custom_call.1} parent=11 // pred_check
          %p181 = pneg %p75
        $region14: #{tpu_custom_call.1} parent=11 // pred_check_branch
          %183 = sbr.rel (%p181) target = $region16
        $region15: #{tpu_custom_call.1} parent=11 // pred_region
          _
        $region16: #{tpu_custom_call.1} parent=11 // pred_fallthru
          _
        // Predicated region
        $region17: #{tpu_custom_call.1} parent=11 // pred_check
          %p184 = pneg %p96
        $region18: #{tpu_custom_call.1} parent=11 // pred_check_branch
          %186 = sbr.rel (%p184) target = $region20
        $region19: #{tpu_custom_call.1} parent=11 // pred_region
          _
        $region20: #{tpu_custom_call.1} parent=11 // pred_fallthru
          _
        // Predicated region
        $region21: #{tpu_custom_call.1} parent=11 // pred_check
          %p187 = pneg %p117
        $region22: #{tpu_custom_call.1} parent=11 // pred_check_branch
          %189 = sbr.rel (%p187) target = $region24
        $region23: #{tpu_custom_call.1} parent=11 // pred_region
          _
        $region24: #{tpu_custom_call.1} parent=11 // pred_fallthru
          _
        // Predicated region
        $region25: #{tpu_custom_call.1} parent=11 // pred_check
          %p190 = pneg %p138
        $region26: #{tpu_custom_call.1} parent=11 // pred_check_branch
          %192 = sbr.rel (%p190) target = $region28
        $region27: #{tpu_custom_call.1} parent=11 // pred_region
          _
        $region28: #{tpu_custom_call.1} parent=11 // pred_fallthru
          _
      $region12: #{tpu_custom_call.1} parent=5 // pred_fallthru
        _
      %p193 = scmp.lt.s32.totalorder %s14, 2
      // Predicated region
      $region29: #{tpu_custom_call.1} parent=5 // pred_check
        %p194 = pneg %p193
      $region30: #{tpu_custom_call.1} parent=5 // pred_check_branch
        %196 = sbr.rel (%p194) target = $region32
      $region31: #{tpu_custom_call.1} parent=5 // pred_region
        // Predicated region
        $region33: #{tpu_custom_call.1} parent=31 // pred_check
          %p197 = pneg %p48
        $region34: #{tpu_custom_call.1} parent=31 // pred_check_branch
          %199 = sbr.rel (%p197) target = $region36
        $region35: #{tpu_custom_call.1} parent=31 // pred_region
          %s200 = smul.u32 2, %s22
          %p201 = scmp.lt.s32.totalorder %s21, 1
          %s202 = scalar_select %p201, %s21, 1
          %p203 = scmp.lt.s32.totalorder %s200, 1
          %s204 = scalar_select %p203, %s200, 1
          %s205 = smul.addr %s202, 2
          %s206 = sadd.s32 %s204, %s205
          %s207 = smul.addr %s206, 4
          %s208 = scalar_lea.vmem %s0, %s207
          %s209 = smul.u32 2, %s22
        $region36: #{tpu_custom_call.1} parent=31 // pred_fallthru
          _
      $region32: #{tpu_custom_call.1} parent=5 // pred_fallthru
        _
      %p210 = scmp.le.s32.totalorder 1, %s14
      %p211 = scmp.lt.s32.totalorder %s14, 3
      %p212 = pnand %p210, %p211
      %p213 = pneg %p212
      // Predicated region
      $region37: #{tpu_custom_call.1} parent=5 // pred_check
        _
      $region38: #{tpu_custom_call.1} parent=5 // pred_check_branch
        %215 = sbr.rel (%p212) target = $region40
      $region39: #{tpu_custom_call.1} parent=5 // pred_region
        %s216 = ssub.s32 %s14, 1
        %s217 = smul.u32 2, %s24
        %p218 = scmp.lt.s32.totalorder %s23, 1
        %s219 = scalar_select %p218, %s23, 1
        %p220 = scmp.lt.s32.totalorder %s217, 1
        %s221 = scalar_select %p220, %s217, 1
        %s222 = smul.addr %s219, 2
        %s223 = sadd.s32 %s221, %s222
        %s224 = smul.addr %s223, 4
        %s225 = scalar_lea.vmem %s0, %s224
        %p226 = pneg %p54
        %p227 = pneg %p51
        %p228 = pneg %p75
        %p229 = pneg %p72
        %p230 = pneg %p96
        %p231 = pneg %p93
        %p232 = pneg %p117
        %p233 = pneg %p114
        %p234 = pneg %p138
        %p235 = pneg %p135
        %p236 = pneg %p166
        %p237 = pneg %p163
        %s238 = sand.u32 %s153, 1
        %s239 = scalar_lea.sflag [#allocation3], %s238
        %s240 = sand.u32 %s153, 1
        %s241 = smul.addr %s240, 8
        %s242 = scalar_lea.vmem [#allocation2], %s241
        %s243 = smul.u32 2, %s24
        %p244 = scmp.lt.s32.totalorder %s23, 1
        %s245 = scalar_select %p244, %s23, 1
        %p246 = scmp.lt.s32.totalorder %s243, 1
        %s247 = scalar_select %p246, %s243, 1
        %s248 = smul.addr %s245, 2
        %s249 = sadd.s32 %s247, %s248
        %s250 = smul.addr %s249, 4
        %s251 = scalar_lea.vmem %s0, %s250
        %s252 = smul.u32 2, %s24
        %s253 = smul.u32 2, %s24
        %v254 = vld [vmem:[%s251] sm:$0xff]
        %v255 = vld [vmem:[%s1] sm:$0xff]
        %v256 = vld [vmem:[%s2] sm:$0xff]
        %258 = vset.pattern.permute.xlu0 0
        %259 = vperm.xlu0 %258, %v256
        %v260 = vpop.permute.xlu0 %259
        %263 = vst [vmem:[#allocation1] ss:$2 sm:$0xff] %v254
        %v264 = vld.sshfl [vmem:[#allocation1] sm:$0xff pattern:$0x75316420]
        %v265 = vld.sshfl [vmem:[#allocation1 + $0x8] sm:$0xff pattern:$0x75316420]
        %vm266 = vcmask 31744
        %v268 = vsel %vm266, %v255, 0
        %vm270 = vcmask 1043456
        %v271 = vsel %vm270, %v264, 0
        %v273 = vsel %vm270, %v265, 0
        %275 = vmatpush.msra.mxu0 0.0
        %276 = vmatpush.msra.mxu0 0.0
        %277 = vmatpush.msra.mxu0 0.0
        %278 = vmatpush.msra.mxu0 0.0
        %279 = vmatpush.msra.mxu0 0.0
        %280 = vmatpush.msra.mxu0 0.0
        %281 = vmatpush.msra.mxu0 0.0
        %282 = vmatpush.msra.mxu0 0.0
        %283 = vmatpush.msra.mxu0 0.0
        %284 = vmatpush.msra.mxu0 0.0
        %285 = vmatpush.msra.mxu0 0.0
        %286 = vmatpush.msra.mxu0 0.0
        %287 = vmatpush.msra.mxu0 0.0
        %288 = vmatpush.msra.mxu0 0.0
        %289 = vmatpush.msra.mxu0 0.0
        %290 = vmatpush.msra.mxu0 %v271
        %291 = vmatmul.f32.gmra.mxu0 %v268
        %v292 = vpop.f32.mrf.mxu0
        %v293 = vadd.f32 %v260, %v292
        %294 = vdwg.mxu0
        %295 = vmatpush.msra.mxu0 0.0
        %296 = vmatpush.msra.mxu0 0.0
        %297 = vmatpush.msra.mxu0 0.0
        %298 = vmatpush.msra.mxu0 0.0
        %299 = vmatpush.msra.mxu0 0.0
        %300 = vmatpush.msra.mxu0 0.0
        %301 = vmatpush.msra.mxu0 0.0
        %302 = vmatpush.msra.mxu0 0.0
        %303 = vmatpush.msra.mxu0 0.0
        %304 = vmatpush.msra.mxu0 0.0
        %305 = vmatpush.msra.mxu0 0.0
        %306 = vmatpush.msra.mxu0 0.0
        %307 = vmatpush.msra.mxu0 0.0
        %308 = vmatpush.msra.mxu0 0.0
        %309 = vmatpush.msra.mxu0 0.0
        %310 = vmatpush.msra.mxu0 %v273
        %311 = vmatmul.f32.gmra.mxu0 %v268
        %v312 = vpop.f32.mrf.mxu0
        %v313 = vadd.f32 %v260, %v312
        %314 = vdwg.mxu0
        %v315 = vmul.f32 %v293, 0.5
        %v316 = vmul.f32 %v313, 0.5
        %v317 = vmul.f32 %v293, 0.70710677
        %v318 = vmul.f32 %v313, 0.70710677
        %v319 = vmul.f32 %v317, %v317
        %v320 = vmin.f32 16.0, %v319
        %v321 = vmul.f32 %v320, 2.1237322e-06
        %v322 = vadd.f32 %v321, 0.00028619796
        %v323 = vmul.f32 %v320, %v322
        %v324 = vadd.f32 %v323, 0.0036580483
        %v325 = vmul.f32 %v320, %v324
        %v326 = vadd.f32 %v325, 0.05243302
        %v327 = vmul.f32 %v320, %v326
        %v328 = vadd.f32 %v327, 0.18741608
        %v329 = vmul.f32 %v320, %v328
        %v330 = vadd.f32 %v329, 1.1283791
        %v331 = vmul.f32 %v317, %v330
        %v332 = vmul.f32 %v320, 3.8918573e-05
        %v333 = vadd.f32 %v332, 0.001143296
        %v334 = vmul.f32 %v320, %v333
        %v335 = vadd.f32 %v334, 0.014752088
        %v336 = vmul.f32 %v320, %v335
        %v337 = vadd.f32 %v336, 0.112945676
        %v338 = vmul.f32 %v320, %v337
        %v339 = vadd.f32 %v338, 0.4994258
        %v340 = vmul.f32 %v320, %v339
        %v341 = vadd.f32 %v340, 1.0
        %v342 = vrcp.pop %v341
        %v343 = vmul.f32 %v341, %v342
        %v344 = vsub.f32 1.0, %v343
        %v345 = vmul.f32 %v342, %v344
        %v346 = vadd.f32 %v342, %v345
        %vm347 = vweird.f32 %v341
        %vm348 = vweird.f32 %v342
        %vm349 = vmor %vm347, %vm348
        %v350 = vsel %vm349, %v342, %v346
        %v351 = vand.u32 2147483647, %v341
        %vm352 = vcmp.eq.f32.partialorder %v351, 8.507059e+37
        %v353 = vand.u32 %v341, 2147483648
        %v354 = vor.u32 1.1754944e-38, %v353
        %v355 = vsel %vm352, %v354, %v350
        %v356 = vmul.f32 %v331, %v355
        %v357 = vmin.f32 %v356, 1.0
        %v358 = vmax.f32 %v357, -1.0
        %v359 = vmul.f32 %v318, %v318
        %v360 = vmin.f32 16.0, %v359
        %v361 = vmul.f32 %v360, 2.1237322e-06
        %v362 = vadd.f32 %v361, 0.00028619796
        %v363 = vmul.f32 %v360, %v362
        %v364 = vadd.f32 %v363, 0.0036580483
        %v365 = vmul.f32 %v360, %v364
        %v366 = vadd.f32 %v365, 0.05243302
        %v367 = vmul.f32 %v360, %v366
        %v368 = vadd.f32 %v367, 0.18741608
        %v369 = vmul.f32 %v360, %v368
        %v370 = vadd.f32 %v369, 1.1283791
        %v371 = vmul.f32 %v318, %v370
        %v372 = vmul.f32 %v360, 3.8918573e-05
        %v373 = vadd.f32 %v372, 0.001143296
        %v374 = vmul.f32 %v360, %v373
        %v375 = vadd.f32 %v374, 0.014752088
        %v376 = vmul.f32 %v360, %v375
        %v377 = vadd.f32 %v376, 0.112945676
        %v378 = vmul.f32 %v360, %v377
        %v379 = vadd.f32 %v378, 0.4994258
        %v380 = vmul.f32 %v360, %v379
        %v381 = vadd.f32 %v380, 1.0
        %v382 = vrcp.pop %v381
        %v383 = vmul.f32 %v381, %v382
        %v384 = vsub.f32 1.0, %v383
        %v385 = vmul.f32 %v382, %v384
        %v386 = vadd.f32 %v382, %v385
        %vm387 = vweird.f32 %v381
        %vm388 = vweird.f32 %v382
        %vm389 = vmor %vm387, %vm388
        %v390 = vsel %vm389, %v382, %v386
        %v391 = vand.u32 2147483647, %v381
        %vm392 = vcmp.eq.f32.partialorder %v391, 8.507059e+37
        %v393 = vand.u32 %v381, 2147483648
        %v394 = vor.u32 1.1754944e-38, %v393
        %v395 = vsel %vm392, %v394, %v390
        %v396 = vmul.f32 %v371, %v395
        %v397 = vmin.f32 %v396, 1.0
        %v398 = vmax.f32 %v397, -1.0
        %v399 = vadd.f32 %v358, 1.0
        %v400 = vadd.f32 %v398, 1.0
        %v401 = vmul.f32 %v315, %v399
        %v402 = vmul.f32 %v316, %v400
        %v403 = vld [vmem:[%s3] sm:$0xf]
        %v404 = vld [vmem:[%s4] sm:$0xf]
        %406 = vset.pattern.permute.xlu0 0
        %407 = vperm.xlu0 %406, %v404
        %v408 = vpop.permute.xlu0 %407
        %vm410 = vcmask 64512
        %v412 = vsel %vm410, %v403, 0
        %414 = vmatpush.msra.mxu0 0.0
        %415 = vmatpush.msra.mxu0 0.0
        %416 = vmatpush.msra.mxu0 0.0
        %417 = vmatpush.msra.mxu0 0.0
        %418 = vmatpush.msra.mxu0 0.0
        %419 = vmatpush.msra.mxu0 0.0
        %420 = vmatpush.msra.mxu0 0.0
        %421 = vmatpush.msra.mxu0 0.0
        %422 = vmatpush.msra.mxu0 0.0
        %423 = vmatpush.msra.mxu0 0.0
        %424 = vmatpush.msra.mxu0 0.0
        %425 = vmatpush.msra.mxu0 0.0
        %426 = vmatpush.msra.mxu0 0.0
        %427 = vmatpush.msra.mxu0 0.0
        %428 = vmatpush.msra.mxu0 0.0
        %429 = vmatpush.msra.mxu0 %v401
        %430 = vmatmul.f32.gmra.mxu0 %v412
        %v431 = vpop.f32.mrf.mxu0
        %v432 = vadd.f32 %v408, %v431
        %433 = vdwg.mxu0
        %434 = vmatpush.msra.mxu0 0.0
        %435 = vmatpush.msra.mxu0 0.0
        %436 = vmatpush.msra.mxu0 0.0
        %437 = vmatpush.msra.mxu0 0.0
        %438 = vmatpush.msra.mxu0 0.0
        %439 = vmatpush.msra.mxu0 0.0
        %440 = vmatpush.msra.mxu0 0.0
        %441 = vmatpush.msra.mxu0 0.0
        %442 = vmatpush.msra.mxu0 0.0
        %443 = vmatpush.msra.mxu0 0.0
        %444 = vmatpush.msra.mxu0 0.0
        %445 = vmatpush.msra.mxu0 0.0
        %446 = vmatpush.msra.mxu0 0.0
        %447 = vmatpush.msra.mxu0 0.0
        %448 = vmatpush.msra.mxu0 0.0
        %449 = vmatpush.msra.mxu0 %v402
        %450 = vmatmul.f32.gmra.mxu0 %v412
        %v451 = vpop.f32.mrf.mxu0
        %v452 = vadd.f32 %v408, %v451
        %453 = vdwg.mxu0
        %v456 = vrot.slane %v452, 4
        %v457 = vsel %vm270, %v432, %v456
        %v459 = vadd.f32 %v254, %v457
        %460 = vst [vmem:[%s242] sm:$0xff] %v459
        %s461 = sand.u32 %s153, 1
        %s462 = scalar_lea.sflag [#allocation3], %s461
        %s463 = sand.u32 %s153, 1
        %s464 = smul.addr %s463, 8
        %s465 = scalar_lea.vmem [#allocation2], %s464
        // Predicated region
        $region41: #{tpu_custom_call.1} parent=39 // pred_check
          %p466 = pneg %p163
        $region42: #{tpu_custom_call.1} parent=39 // pred_check_branch
          %468 = sbr.rel (%p466) target = $region44
        $region43: #{tpu_custom_call.1} parent=39 // pred_region
          %s469 = smul.u32 2, %s24
          %471 = vsyncadd %s462, 0
          %s472 = smul.addr %s23, 2
          %s473 = sadd.s32 %s469, %s472
          %s474 = smul.addr %s473, 4
          %s475 = scalar_lea.hbm %s5, %s474
          %s477 = sshll.u32 %s465, 4
          %s478 = int_to_ptr.vmem [resolvable:$true] %s477
          %s479 = sshll.u32 %s475, 4
          %s480 = int_to_ptr.hbm [resolvable:$true] %s479
          %482 = dma.vmem_to_hbm [thread:$0]  %s478, 128, %s480, %s462
        $region44: #{tpu_custom_call.1} parent=39 // pred_fallthru
          _
      $region40: #{tpu_custom_call.1} parent=5 // pred_fallthru
        _
      %p483 = scmp.le.s32.totalorder 2, %s14
      // Predicated region
      $region45: #{tpu_custom_call.1} parent=5 // pred_check
        %p484 = pneg %p483
      $region46: #{tpu_custom_call.1} parent=5 // pred_check_branch
        %486 = sbr.rel (%p484) target = $region48
      $region47: #{tpu_custom_call.1} parent=5 // pred_region
        %s487 = ssub.s32 %s14, 2
        // Predicated region
        $region49: #{tpu_custom_call.1} parent=47 // pred_check
          %p488 = pneg %p169
        $region50: #{tpu_custom_call.1} parent=47 // pred_check_branch
          %490 = sbr.rel (%p488) target = $region52
        $region51: #{tpu_custom_call.1} parent=47 // pred_region
          %s491 = sand.u32 %s154, 1
          %s492 = scalar_lea.sflag [#allocation3], %s491
          %s493 = sand.u32 %s154, 1
          %s494 = smul.addr %s493, 8
          %s495 = scalar_lea.vmem [#allocation2], %s494
          %497 = dma.done %s492, 128
        $region52: #{tpu_custom_call.1} parent=47 // pred_fallthru
          _
      $region48: #{tpu_custom_call.1} parent=5 // pred_fallthru
        _
    $region6: #{tpu_custom_call.1} parent=1 // loop_footer
      %s18 = sadd.s32 1, %s14
    $region7: #{tpu_custom_call.1} parent=1 // loop_footer_branch
      %13 = sbr.rel target = $region3
    $region8: #{tpu_custom_call.1} parent=1 // loop_exit
      _
    %498 = vsyncpa [#allocation3], 1
    %s499 = scalar_lea.sflag [#allocation3], 1
    %500 = vsyncpa %s499, 1

</llo_original>
